<compile_context>
chip_gen: v6e
topology: v6e:2x2x1
jax: 0.10.0
libtpu: 0.0.40
codegen_flags: <defaults>
</compile_context>

<pallas_src>
import jax
import jax.numpy as jnp
from jax.experimental import pallas as pl
from jax.experimental.pallas import tpu as pltpu


def encoder_kernel(x_ref, w1_ref, b1_ref, wh_ref, bh_ref, mu_ref, lv_ref):
    L = mu_ref.shape[-1]
    # Cast the f32 activation tile to bf16 in-kernel (VPU; hidden under MXU).
    x = x_ref[...].astype(jnp.bfloat16)
    # Hidden layer: bf16 MXU matmul with f32 accumulation, f32 bias + LeakyReLU.
    h = jnp.dot(x, w1_ref[...], preferred_element_type=jnp.float32) + b1_ref[...]
    e = jnp.where(h > 0, h, 0.2 * h)                       # LeakyReLU(0.2), f32 VPU
    # Fused mu|log_var heads: single N = 2*latent matmul, bf16 in / f32 acc.
    out = jnp.dot(e.astype(wh_ref.dtype), wh_ref[...],
                  preferred_element_type=jnp.float32) + bh_ref[...]
    # Split at a lane-aligned boundary (L multiple of 128 in practice).
    mu_ref[...] = out[:, :L].astype(mu_ref.dtype)
    lv_ref[...] = out[:, L:].astype(lv_ref.dtype)


def _round_up(n, m):
    return ((n + m - 1) // m) * m


def _choose_tb(B, max_tb=256):
    """Pick a sublane-aligned batch tile minimizing padding while keeping the
    MXU reasonably filled; prefer >=2 grid steps for megacore (v7x)."""
    B8 = _round_up(B, 8)
    if B8 <= max_tb:
        # Single launch worth of rows: split in two for 2 TCs once each half
        # still fills >=64 MXU rows; otherwise one tile.
        if B8 >= 128:
            return _round_up((B8 + 1) // 2, 8)
        return B8
    # Larger batches: choose among {max_tb, max_tb/2, max_tb/4} the tile with
    # the least padded rows (ties -> bigger tile).
    best_tb = max_tb
    best_pad = _round_up(B8, max_tb) - B8
    for tb in (max_tb, max_tb // 2, max_tb // 4):
        pad = _round_up(B8, tb) - B8
        if pad < best_pad:
            best_tb, best_pad = tb, pad
    return best_tb


def prepare_params(params):
    """ONE-TIME weight prep (do not call per forward): bf16 cast + head fusion."""
    return {
        "w1": params["w1"].astype(jnp.bfloat16),
        "b1": params["b1"].astype(jnp.float32).reshape(1, -1),
        "wh": jnp.concatenate([params["wm"], params["wv"]], axis=1).astype(jnp.bfloat16),
        "bh": jnp.concatenate([params["bm"], params["bv"]], axis=1)
                 .astype(jnp.float32).reshape(1, -1),
        "latent_dim": int(params["wm"].shape[1]),
    }


def encoder_forward(x_img, prep, *, max_tb=256):
    """x_img: (B, C, H, W) float32. prep: output of prepare_params.
    Returns (mu, log_var), each (B, latent)."""
    B = x_img.shape[0]
    x = x_img.reshape(B, -1)                      # torch: x.view(len(x), -1); stays f32
    D = x.shape[1]

    w1, b1, wh, bh = prep["w1"], prep["b1"], prep["wh"], prep["bh"]
    Hd = w1.shape[1]
    L = prep["latent_dim"]
    L2 = wh.shape[1]

    tb = _choose_tb(B, max_tb)
    B_pad = _round_up(B, tb)
    if B_pad != B:
        x = jnp.pad(x, ((0, B_pad - B), (0, 0)))
    grid = (B_pad // tb,)

    # Explicit VMEM budget from actual buffer sizes (headroom x2, cap at v7x
    # physical 64 MiB, never below the 32 MiB scoped default).
    x_vmem = 2 * tb * D * 4                               # f32 x tile, 2 bufs
    w_vmem = D * Hd * 2 + Hd * L2 * 2                     # bf16 weights, 1 buf
    bias_vmem = (Hd + L2) * 4
    out_vmem = 2 * 2 * tb * L * 4                         # mu + lv tiles, 2 bufs each
    tmp_vmem = tb * Hd * (4 + 4 + 2) + tb * L2 * 4        # h, e (f32), e (bf16), head acc
    vmem_limit = min(max(2 * (x_vmem + w_vmem + bias_vmem + out_vmem + tmp_vmem),
                         32 << 20), 64 << 20)

    flops = 2 * B_pad * D * Hd + 2 * B_pad * Hd * L2
    bytes_accessed = (B_pad * D * 4 + D * Hd * 2 + Hd * L2 * 2
                      + (Hd + L2) * 4 + 2 * B_pad * L * 4)

    fn = pl.pallas_call(
        encoder_kernel,
        grid_spec=pltpu.PrefetchScalarGridSpec(
            num_scalar_prefetch=0,
            grid=grid,
            in_specs=[
                pl.BlockSpec((tb, D), lambda i: (i, 0)),                 # x tile (f32)
                pl.BlockSpec((D, Hd), lambda i: (0, 0),
                             pipeline_mode=pl.Buffered(1)),              # W1 (resident)
                pl.BlockSpec((1, Hd), lambda i: (0, 0),
                             pipeline_mode=pl.Buffered(1)),              # b1
                pl.BlockSpec((Hd, L2), lambda i: (0, 0),
                             pipeline_mode=pl.Buffered(1)),              # [Wm | Wv]
                pl.BlockSpec((1, L2), lambda i: (0, 0),
                             pipeline_mode=pl.Buffered(1)),              # [bm | bv]
            ],
            out_specs=[
                pl.BlockSpec((tb, L), lambda i: (i, 0)),                 # mu
                pl.BlockSpec((tb, L), lambda i: (i, 0)),                 # log_var
            ],
        ),
        out_shape=(jax.ShapeDtypeStruct((B_pad, L), jnp.float32),
                   jax.ShapeDtypeStruct((B_pad, L), jnp.float32)),
        compiler_params=pltpu.CompilerParams(
            dimension_semantics=("parallel",),
            vmem_limit_bytes=int(vmem_limit)),
        cost_estimate=pl.CostEstimate(
            flops=flops, transcendentals=0, bytes_accessed=bytes_accessed),
    )
    mu, log_var = fn(x, w1, b1, wh, bh)
    if B_pad != B:
        mu, log_var = mu[:B], log_var[:B]
    return mu, log_var


def init_encoder_params(key, input_dim, hid_dim, latent_dim):
    """Deterministic init mimicking torch.nn.Linear default (U[-1/sqrt(fan_in), ...]).
    Weights stored as (in_features, out_features)."""
    ks = jax.random.split(key, 6)

    def lin(kw, kb, fan_in, fan_out):
        bound = 1.0 / jnp.sqrt(fan_in)
        w = jax.random.uniform(kw, (fan_in, fan_out), jnp.float32, -bound, bound)
        b = jax.random.uniform(kb, (1, fan_out), jnp.float32, -bound, bound)
        return w, b

    w1, b1 = lin(ks[0], ks[1], input_dim, hid_dim)
    wm, bm = lin(ks[2], ks[3], hid_dim, latent_dim)
    wv, bv = lin(ks[4], ks[5], hid_dim, latent_dim)
    return {"w1": w1, "b1": b1, "wm": wm, "bm": bm, "wv": wv, "bv": bv}


def encoder_ref(x_img, params):
    """Pure-JAX reference using the same bf16-in / f32-accumulate recipe."""
    x = x_img.reshape(x_img.shape[0], -1).astype(jnp.bfloat16)
    h = jnp.dot(x, params["w1"].astype(jnp.bfloat16),
                preferred_element_type=jnp.float32) + params["b1"]
    e = jnp.where(h > 0, h, 0.2 * h)
    e_bf = e.astype(jnp.bfloat16)
    mu = jnp.dot(e_bf, params["wm"].astype(jnp.bfloat16),
                 preferred_element_type=jnp.float32) + params["bm"]
    lv = jnp.dot(e_bf, params["wv"].astype(jnp.bfloat16),
                 preferred_element_type=jnp.float32) + params["bv"]
    return mu, lv


if __name__ == "__main__":
    # Small shapes consistent with the module: images (B, C, H, W) flattened
    # to input_dim = C*H*W = 1024, hid_dim=256, latent_dim=128.
    B, C, Hsp, Wsp = 2, 4, 16, 16
    input_dim = C * Hsp * Wsp
    hid_dim = 256
    latent_dim = 128

    key = jax.random.PRNGKey(0)
    k_x, k_p = jax.random.split(key)
    x = jax.random.normal(k_x, (B, C, Hsp, Wsp), dtype=jnp.float32)
    params = init_encoder_params(k_p, input_dim, hid_dim, latent_dim)
    prep = prepare_params(params)          # one-time weight prep (bf16 + fusion)

    mu, log_var = encoder_forward(x, prep)
    jax.block_until_ready((mu, log_var))

    mu_ref, lv_ref = encoder_ref(x, params)
    assert mu.shape == (B, latent_dim) and log_var.shape == (B, latent_dim)
    assert jnp.allclose(mu, mu_ref, atol=2e-2, rtol=2e-2)
    assert jnp.allclose(log_var, lv_ref, atol=2e-2, rtol=2e-2)

    print("KERNEL_OK")
</pallas_src>

<mosaic_0001>
module attributes {stable_mosaic.version = 11 : i64} {
  func.func @encoder_kernel(%arg0: i32, %arg1: memref<8x1024xf32, #tpu.memory_space<vmem>>, %arg2: memref<1024x256xbf16, #tpu.memory_space<vmem>>, %arg3: memref<1x256xf32, #tpu.memory_space<vmem>>, %arg4: memref<256x256xbf16, #tpu.memory_space<vmem>>, %arg5: memref<1x256xf32, #tpu.memory_space<vmem>>, %arg6: memref<8x128xf32, #tpu.memory_space<vmem>>, %arg7: memref<8x128xf32, #tpu.memory_space<vmem>>) attributes {dimension_semantics = [#tpu.dimension_semantics<parallel>], iteration_bounds = array<i64: 1>, scalar_prefetch = 0 : i64, scratch_operands = 0 : i64, tpu.core_type = #tpu.core_type<tc>, window_params = [{transform_indices = @transform_0, window_bounds = array<i64: 8, 1024>}, {pipeline_mode = #tpu.pipeline_mode<synchronous>, transform_indices = @transform_1, window_bounds = array<i64: 1024, 256>}, {pipeline_mode = #tpu.pipeline_mode<synchronous>, transform_indices = @transform_2, window_bounds = array<i64: 1, 256>}, {pipeline_mode = #tpu.pipeline_mode<synchronous>, transform_indices = @transform_3, window_bounds = array<i64: 256, 256>}, {pipeline_mode = #tpu.pipeline_mode<synchronous>, transform_indices = @transform_4, window_bounds = array<i64: 1, 256>}, {transform_indices = @transform_5, window_bounds = array<i64: 8, 128>}, {transform_indices = @transform_6, window_bounds = array<i64: 8, 128>}]} {
    %c0 = arith.constant 0 : index
    %c0_0 = arith.constant 0 : index
    %0 = vector.load %arg1[%c0, %c0_0] : memref<8x1024xf32, #tpu.memory_space<vmem>>, vector<8x1024xf32>
    %1 = arith.truncf %0 : vector<8x1024xf32> to vector<8x1024xbf16>
    %c0_1 = arith.constant 0 : index
    %c0_2 = arith.constant 0 : index
    %2 = vector.load %arg2[%c0_1, %c0_2] : memref<1024x256xbf16, #tpu.memory_space<vmem>>, vector<1024x256xbf16>
    %cst = arith.constant dense<0.000000e+00> : vector<8x256xf32>
    %3 = tpu.matmul %1, %2, %cst {dimension_numbers = #tpu.dot_dimension_numbers<[1], [0], [0], [1], [0, 0, 1, 1], [], []>} : vector<8x1024xbf16>, vector<1024x256xbf16>, vector<8x256xf32> -> vector<8x256xf32>
    %c0_3 = arith.constant 0 : index
    %c0_4 = arith.constant 0 : index
    %4 = vector.load %arg3[%c0_3, %c0_4] : memref<1x256xf32, #tpu.memory_space<vmem>>, vector<1x256xf32>
    %5 = vector.broadcast %4 : vector<1x256xf32> to vector<8x256xf32>
    %6 = arith.addf %3, %5 : vector<8x256xf32>
    %cst_5 = arith.constant 0.000000e+00 : f32
    %7 = vector.broadcast %cst_5 : f32 to vector<8x256xf32>
    %8 = arith.cmpf ogt, %6, %7 : vector<8x256xf32>
    %cst_6 = arith.constant 2.000000e-01 : f32
    %9 = vector.broadcast %cst_6 : f32 to vector<8x256xf32>
    %10 = arith.mulf %9, %6 : vector<8x256xf32>
    %11 = arith.select %8, %6, %10 : vector<8x256xi1>, vector<8x256xf32>
    %12 = arith.truncf %11 : vector<8x256xf32> to vector<8x256xbf16>
    %c0_7 = arith.constant 0 : index
    %c0_8 = arith.constant 0 : index
    %13 = vector.load %arg4[%c0_7, %c0_8] : memref<256x256xbf16, #tpu.memory_space<vmem>>, vector<256x256xbf16>
    %cst_9 = arith.constant dense<0.000000e+00> : vector<8x256xf32>
    %14 = tpu.matmul %12, %13, %cst_9 {dimension_numbers = #tpu.dot_dimension_numbers<[1], [0], [0], [1], [0, 0, 1, 1], [], []>} : vector<8x256xbf16>, vector<256x256xbf16>, vector<8x256xf32> -> vector<8x256xf32>
    %c0_10 = arith.constant 0 : index
    %c0_11 = arith.constant 0 : index
    %15 = vector.load %arg5[%c0_10, %c0_11] : memref<1x256xf32, #tpu.memory_space<vmem>>, vector<1x256xf32>
    %16 = vector.broadcast %15 : vector<1x256xf32> to vector<8x256xf32>
    %17 = arith.addf %14, %16 : vector<8x256xf32>
    %18 = vector.extract_strided_slice %17 {offsets = [0, 0], sizes = [8, 128], strides = [1, 1]} : vector<8x256xf32> to vector<8x128xf32>
    %c0_12 = arith.constant 0 : index
    %c0_13 = arith.constant 0 : index
    %19 = vector.load %arg6[%c0_12, %c0_13] : memref<8x128xf32, #tpu.memory_space<vmem>>, vector<8x128xf32>
    tpu.vector_store %arg6[%c0_12, %c0_13], %18 {strides = array<i32>} : memref<8x128xf32, #tpu.memory_space<vmem>>, vector<8x128xf32>,
    %20 = vector.extract_strided_slice %17 {offsets = [0, 128], sizes = [8, 128], strides = [1, 1]} : vector<8x256xf32> to vector<8x128xf32>
    %c0_14 = arith.constant 0 : index
    %c0_15 = arith.constant 0 : index
    %21 = vector.load %arg7[%c0_14, %c0_15] : memref<8x128xf32, #tpu.memory_space<vmem>>, vector<8x128xf32>
    tpu.vector_store %arg7[%c0_14, %c0_15], %20 {strides = array<i32>} : memref<8x128xf32, #tpu.memory_space<vmem>>, vector<8x128xf32>,
    return
  }
  func.func @transform_0(%arg0: i32) -> (i32, i32) {
    %c0_i32 = arith.constant 0 : i32
    %c0_i32_0 = arith.constant 0 : i32
    return %arg0, %c0_i32 : i32, i32
  }
  func.func @transform_1(%arg0: i32) -> (i32, i32) {
    %c0_i32 = arith.constant 0 : i32
    %c0_i32_0 = arith.constant 0 : i32
    %c0_i32_1 = arith.constant 0 : i32
    return %c0_i32, %c0_i32_0 : i32, i32
  }
  func.func @transform_2(%arg0: i32) -> (i32, i32) {
    %c0_i32 = arith.constant 0 : i32
    %c0_i32_0 = arith.constant 0 : i32
    %c0_i32_1 = arith.constant 0 : i32
    return %c0_i32, %c0_i32_0 : i32, i32
  }
  func.func @transform_3(%arg0: i32) -> (i32, i32) {
    %c0_i32 = arith.constant 0 : i32
    %c0_i32_0 = arith.constant 0 : i32
    %c0_i32_1 = arith.constant 0 : i32
    return %c0_i32, %c0_i32_0 : i32, i32
  }
  func.func @transform_4(%arg0: i32) -> (i32, i32) {
    %c0_i32 = arith.constant 0 : i32
    %c0_i32_0 = arith.constant 0 : i32
    %c0_i32_1 = arith.constant 0 : i32
    return %c0_i32, %c0_i32_0 : i32, i32
  }
  func.func @transform_5(%arg0: i32) -> (i32, i32) {
    %c0_i32 = arith.constant 0 : i32
    %c0_i32_0 = arith.constant 0 : i32
    return %arg0, %c0_i32 : i32, i32
  }
  func.func @transform_6(%arg0: i32) -> (i32, i32) {
    %c0_i32 = arith.constant 0 : i32
    %c0_i32_0 = arith.constant 0 : i32
    return %arg0, %c0_i32 : i32, i32
  }
}

</mosaic_0001>

<llo_original>
// kernel: tpu_custom_call.1
$region0: #{tpu_custom_call.1}
  #allocation0 [shape = 'u32[]', space=smem, size = 0x4, offset = 0x4, fixed_abs, tag = 'smem constant byte address 0x4 - core index']
  #allocation1 [shape = 'u32[144,128]{1,0:T(1,128)}', space=vmem, size = 0x12000, scoped, tag = 'internal scratch']
  %s0 = inlined_call_operand.hbm [shape: f32[8,1024], index: 0, kind: input, shape index: {}]
  %s1 = inlined_call_operand.hbm [shape: bf16[1024,256], index: 1, kind: input, shape index: {}]
  %s2 = inlined_call_operand.vmem [shape: f32[1,256], index: 2, kind: input, shape index: {}]
  %s3 = inlined_call_operand.hbm [shape: bf16[256,256], index: 3, kind: input, shape index: {}]
  %s4 = inlined_call_operand.vmem [shape: f32[1,256], index: 4, kind: input, shape index: {}]
  %s5 = inlined_call_operand.hbm [shape: f32[8,128], index: 5, kind: output, shape index: {0}]
  %s6 = inlined_call_operand.hbm [shape: f32[8,128], index: 6, kind: output, shape index: {1}]
  %7 = xla_tuple %s5, %s6
  %s8 = sld [smem:[#allocation0]]
  $region50: #{tpu_custom_call.1} parent=0
    _
  %s10 = ssub.s32 1, %s8
  %s11 = scalar_select 0, %s10, %s8
  $region1: #{tpu_custom_call.1} parent=0
    #allocation2 [shape = 'u8[32768]{0}', space=vmem, size = 0x8000, scoped, tag = 'input window, operand 0, single buffered']
    #allocation3 [shape = 's32[1]{0}', space=sflag, size = 0x4, scoped, tag = 'scoped memory for tpu_custom_call.1']
    #allocation4 [shape = 's32[1]{0}', space=sflag, size = 0x4, scoped, tag = 'scoped memory for tpu_custom_call.1']
    #allocation5 [shape = 'u8[524288]{0}', space=vmem, size = 0x80000, scoped, tag = 'input window, operand 1, single buffered']
    #allocation6 [shape = 's32[1]{0}', space=sflag, size = 0x4, scoped, tag = 'scoped memory for tpu_custom_call.1']
    #allocation7 [shape = 'u8[131072]{0}', space=vmem, size = 0x20000, scoped, tag = 'input window, operand 3, single buffered']
    #allocation8 [shape = 'u8[4096]{0}', space=vmem, size = 0x1000, scoped, tag = 'output window, operand 0, single buffered']
    #allocation9 [shape = 'u8[4096]{0}', space=vmem, size = 0x1000, scoped, tag = 'output window, operand 1, single buffered']
    #allocation10 [shape = 's32[1]{0}', space=sflag, size = 0x4, scoped, tag = 'scoped memory for tpu_custom_call.1']
    %12 = vsyncpa [#allocation3], 0
    %13 = vsyncpa [#allocation6], 0
    %14 = vsyncpa [#allocation4], 0
    %15 = vsyncpa [#allocation10], 0
    // Predicated region
    $region2: #{tpu_custom_call.1} parent=1 // pred_check
      _
    $region3: #{tpu_custom_call.1} parent=1 // pred_check_branch
      %17 = sbr.rel (0) target = $region5
    $region4: #{tpu_custom_call.1} parent=1 // pred_region
      %s19 = ssub.s32 1024, 1024
      %20 = vsyncadd [#allocation3], %s19
      %s22 = sshll.u32 [#allocation2], 4
      %s23 = int_to_ptr.vmem [resolvable:$true] %s22
      %25 = dma.hbm_to_vmem [thread:$0]  %s0, 1024, %s23, [#allocation3]
    $region5: #{tpu_custom_call.1} parent=1 // pred_fallthru
      _
    // Predicated region
    $region6: #{tpu_custom_call.1} parent=1 // pred_check
      _
    $region7: #{tpu_custom_call.1} parent=1 // pred_check_branch
      %27 = sbr.rel (0) target = $region9
    $region8: #{tpu_custom_call.1} parent=1 // pred_region
      %s29 = ssub.s32 16384, 16384
      %30 = vsyncadd [#allocation6], %s29
      %s31 = sshll.u32 [#allocation5], 4
      %s32 = int_to_ptr.vmem [resolvable:$true] %s31
      %37 = dma.hbm_to_vmem [thread:$0]  %s1, 16384, %s32, [#allocation6], 128, 128, 8
    $region9: #{tpu_custom_call.1} parent=1 // pred_fallthru
      _
    // Predicated region
    $region10: #{tpu_custom_call.1} parent=1 // pred_check
      _
    $region11: #{tpu_custom_call.1} parent=1 // pred_check_branch
      %39 = sbr.rel (0) target = $region13
    $region12: #{tpu_custom_call.1} parent=1 // pred_region
      _
    $region13: #{tpu_custom_call.1} parent=1 // pred_fallthru
      _
    // Predicated region
    $region14: #{tpu_custom_call.1} parent=1 // pred_check
      _
    $region15: #{tpu_custom_call.1} parent=1 // pred_check_branch
      %41 = sbr.rel (0) target = $region17
    $region16: #{tpu_custom_call.1} parent=1 // pred_region
      %s43 = ssub.s32 4096, 4096
      %44 = vsyncadd [#allocation6], %s43
      %s45 = sshll.u32 [#allocation7], 4
      %s46 = int_to_ptr.vmem [resolvable:$true] %s45
      %51 = dma.hbm_to_vmem [thread:$0]  %s3, 4096, %s46, [#allocation6], 128, 128, 8
    $region17: #{tpu_custom_call.1} parent=1 // pred_fallthru
      _
    // Predicated region
    $region18: #{tpu_custom_call.1} parent=1 // pred_check
      _
    $region19: #{tpu_custom_call.1} parent=1 // pred_check_branch
      %53 = sbr.rel (0) target = $region21
    $region20: #{tpu_custom_call.1} parent=1 // pred_region
      _
    $region21: #{tpu_custom_call.1} parent=1 // pred_fallthru
      _
    // Predicated region
    $region22: #{tpu_custom_call.1} parent=1 // pred_check
      _
    $region23: #{tpu_custom_call.1} parent=1 // pred_check_branch
      %55 = sbr.rel (0) target = $region25
    $region24: #{tpu_custom_call.1} parent=1 // pred_region
      %56 = dma.done [#allocation3], 1024
    $region25: #{tpu_custom_call.1} parent=1 // pred_fallthru
      _
    // Predicated region
    $region26: #{tpu_custom_call.1} parent=1 // pred_check
      _
    $region27: #{tpu_custom_call.1} parent=1 // pred_check_branch
      %58 = sbr.rel (0) target = $region29
    $region28: #{tpu_custom_call.1} parent=1 // pred_region
      %59 = dma.done [#allocation6], 16384
    $region29: #{tpu_custom_call.1} parent=1 // pred_fallthru
      _
    // Predicated region
    $region30: #{tpu_custom_call.1} parent=1 // pred_check
      _
    $region31: #{tpu_custom_call.1} parent=1 // pred_check_branch
      %61 = sbr.rel (0) target = $region33
    $region32: #{tpu_custom_call.1} parent=1 // pred_region
      %62 = dma.done [#allocation6], 4096
    $region33: #{tpu_custom_call.1} parent=1 // pred_fallthru
      _
    %v63 = vld [vmem:[#allocation2] sm:$0xff]
    %v64 = vld [vmem:[#allocation2 + $0x8] sm:$0xff]
    %v65 = vld [vmem:[#allocation2 + $0x10] sm:$0xff]
    %v66 = vld [vmem:[#allocation2 + $0x18] sm:$0xff]
    %v67 = vld [vmem:[#allocation2 + $0x20] sm:$0xff]
    %v68 = vld [vmem:[#allocation2 + $0x28] sm:$0xff]
    %v69 = vld [vmem:[#allocation2 + $0x30] sm:$0xff]
    %v70 = vld [vmem:[#allocation2 + $0x38] sm:$0xff]
    %v71 = vpack.c.bf16 %v63, %v63
    %v72 = vpack.c.bf16 %v64, %v64
    %v73 = vpack.c.bf16 %v65, %v65
    %v74 = vpack.c.bf16 %v66, %v66
    %v75 = vpack.c.bf16 %v67, %v67
    %v76 = vpack.c.bf16 %v68, %v68
    %v77 = vpack.c.bf16 %v69, %v69
    %v78 = vpack.c.bf16 %v70, %v70
    %v79 = vld [vmem:[#allocation5] sm:$0xff]
    %v80 = vld [vmem:[#allocation5 + $0x8] sm:$0xff]
    %v81 = vld [vmem:[#allocation5 + $0x10] sm:$0xff]
    %v82 = vld [vmem:[#allocation5 + $0x18] sm:$0xff]
    %v83 = vld [vmem:[#allocation5 + $0x20] sm:$0xff]
    %v84 = vld [vmem:[#allocation5 + $0x28] sm:$0xff]
    %v85 = vld [vmem:[#allocation5 + $0x30] sm:$0xff]
    %v86 = vld [vmem:[#allocation5 + $0x38] sm:$0xff]
    %v87 = vld [vmem:[#allocation5 + $0x40] sm:$0xff]
    %v88 = vld [vmem:[#allocation5 + $0x48] sm:$0xff]
    %v89 = vld [vmem:[#allocation5 + $0x50] sm:$0xff]
    %v90 = vld [vmem:[#allocation5 + $0x58] sm:$0xff]
    %v91 = vld [vmem:[#allocation5 + $0x60] sm:$0xff]
    %v92 = vld [vmem:[#allocation5 + $0x68] sm:$0xff]
    %v93 = vld [vmem:[#allocation5 + $0x70] sm:$0xff]
    %v94 = vld [vmem:[#allocation5 + $0x78] sm:$0xff]
    %v95 = vld [vmem:[#allocation5 + $0x80] sm:$0xff]
    %v96 = vld [vmem:[#allocation5 + $0x88] sm:$0xff]
    %v97 = vld [vmem:[#allocation5 + $0x90] sm:$0xff]
    %v98 = vld [vmem:[#allocation5 + $0x98] sm:$0xff]
    %v99 = vld [vmem:[#allocation5 + $0xa0] sm:$0xff]
    %v100 = vld [vmem:[#allocation5 + $0xa8] sm:$0xff]
    %v101 = vld [vmem:[#allocation5 + $0xb0] sm:$0xff]
    %v102 = vld [vmem:[#allocation5 + $0xb8] sm:$0xff]
    %v103 = vld [vmem:[#allocation5 + $0xc0] sm:$0xff]
    %v104 = vld [vmem:[#allocation5 + $0xc8] sm:$0xff]
    %v105 = vld [vmem:[#allocation5 + $0xd0] sm:$0xff]
    %v106 = vld [vmem:[#allocation5 + $0xd8] sm:$0xff]
    %v107 = vld [vmem:[#allocation5 + $0xe0] sm:$0xff]
    %v108 = vld [vmem:[#allocation5 + $0xe8] sm:$0xff]
    %v109 = vld [vmem:[#allocation5 + $0xf0] sm:$0xff]
    %v110 = vld [vmem:[#allocation5 + $0xf8] sm:$0xff]
    %v111 = vld [vmem:[#allocation5 + $0x100] sm:$0xff]
    %v112 = vld [vmem:[#allocation5 + $0x108] sm:$0xff]
    %v113 = vld [vmem:[#allocation5 + $0x110] sm:$0xff]
    %v114 = vld [vmem:[#allocation5 + $0x118] sm:$0xff]
    %v115 = vld [vmem:[#allocation5 + $0x120] sm:$0xff]
    %v116 = vld [vmem:[#allocation5 + $0x128] sm:$0xff]
    %v117 = vld [vmem:[#allocation5 + $0x130] sm:$0xff]
    %v118 = vld [vmem:[#allocation5 + $0x138] sm:$0xff]
    %v119 = vld [vmem:[#allocation5 + $0x140] sm:$0xff]
    %v120 = vld [vmem:[#allocation5 + $0x148] sm:$0xff]
    %v121 = vld [vmem:[#allocation5 + $0x150] sm:$0xff]
    %v122 = vld [vmem:[#allocation5 + $0x158] sm:$0xff]
    %v123 = vld [vmem:[#allocation5 + $0x160] sm:$0xff]
    %v124 = vld [vmem:[#allocation5 + $0x168] sm:$0xff]
    %v125 = vld [vmem:[#allocation5 + $0x170] sm:$0xff]
    %v126 = vld [vmem:[#allocation5 + $0x178] sm:$0xff]
    %v127 = vld [vmem:[#allocation5 + $0x180] sm:$0xff]
    %v128 = vld [vmem:[#allocation5 + $0x188] sm:$0xff]
    %v129 = vld [vmem:[#allocation5 + $0x190] sm:$0xff]
    %v130 = vld [vmem:[#allocation5 + $0x198] sm:$0xff]
    %v131 = vld [vmem:[#allocation5 + $0x1a0] sm:$0xff]
    %v132 = vld [vmem:[#allocation5 + $0x1a8] sm:$0xff]
    %v133 = vld [vmem:[#allocation5 + $0x1b0] sm:$0xff]
    %v134 = vld [vmem:[#allocation5 + $0x1b8] sm:$0xff]
    %v135 = vld [vmem:[#allocation5 + $0x1c0] sm:$0xff]
    %v136 = vld [vmem:[#allocation5 + $0x1c8] sm:$0xff]
    %v137 = vld [vmem:[#allocation5 + $0x1d0] sm:$0xff]
    %v138 = vld [vmem:[#allocation5 + $0x1d8] sm:$0xff]
    %v139 = vld [vmem:[#allocation5 + $0x1e0] sm:$0xff]
    %v140 = vld [vmem:[#allocation5 + $0x1e8] sm:$0xff]
    %v141 = vld [vmem:[#allocation5 + $0x1f0] sm:$0xff]
    %v142 = vld [vmem:[#allocation5 + $0x1f8] sm:$0xff]
    %v143 = vld [vmem:[#allocation5 + $0x200] sm:$0xff]
    %v144 = vld [vmem:[#allocation5 + $0x208] sm:$0xff]
    %v145 = vld [vmem:[#allocation5 + $0x210] sm:$0xff]
    %v146 = vld [vmem:[#allocation5 + $0x218] sm:$0xff]
    %v147 = vld [vmem:[#allocation5 + $0x220] sm:$0xff]
    %v148 = vld [vmem:[#allocation5 + $0x228] sm:$0xff]
    %v149 = vld [vmem:[#allocation5 + $0x230] sm:$0xff]
    %v150 = vld [vmem:[#allocation5 + $0x238] sm:$0xff]
    %v151 = vld [vmem:[#allocation5 + $0x240] sm:$0xff]
    %v152 = vld [vmem:[#allocation5 + $0x248] sm:$0xff]
    %v153 = vld [vmem:[#allocation5 + $0x250] sm:$0xff]
    %v154 = vld [vmem:[#allocation5 + $0x258] sm:$0xff]
    %v155 = vld [vmem:[#allocation5 + $0x260] sm:$0xff]
    %v156 = vld [vmem:[#allocation5 + $0x268] sm:$0xff]
    %v157 = vld [vmem:[#allocation5 + $0x270] sm:$0xff]
    %v158 = vld [vmem:[#allocation5 + $0x278] sm:$0xff]
    %v159 = vld [vmem:[#allocation5 + $0x280] sm:$0xff]
    %v160 = vld [vmem:[#allocation5 + $0x288] sm:$0xff]
    %v161 = vld [vmem:[#allocation5 + $0x290] sm:$0xff]
    %v162 = vld [vmem:[#allocation5 + $0x298] sm:$0xff]
    %v163 = vld [vmem:[#allocation5 + $0x2a0] sm:$0xff]
    %v164 = vld [vmem:[#allocation5 + $0x2a8] sm:$0xff]
    %v165 = vld [vmem:[#allocation5 + $0x2b0] sm:$0xff]
    %v166 = vld [vmem:[#allocation5 + $0x2b8] sm:$0xff]
    %v167 = vld [vmem:[#allocation5 + $0x2c0] sm:$0xff]
    %v168 = vld [vmem:[#allocation5 + $0x2c8] sm:$0xff]
    %v169 = vld [vmem:[#allocation5 + $0x2d0] sm:$0xff]
    %v170 = vld [vmem:[#allocation5 + $0x2d8] sm:$0xff]
    %v171 = vld [vmem:[#allocation5 + $0x2e0] sm:$0xff]
    %v172 = vld [vmem:[#allocation5 + $0x2e8] sm:$0xff]
    %v173 = vld [vmem:[#allocation5 + $0x2f0] sm:$0xff]
    %v174 = vld [vmem:[#allocation5 + $0x2f8] sm:$0xff]
    %v175 = vld [vmem:[#allocation5 + $0x300] sm:$0xff]
    %v176 = vld [vmem:[#allocation5 + $0x308] sm:$0xff]
    %v177 = vld [vmem:[#allocation5 + $0x310] sm:$0xff]
    %v178 = vld [vmem:[#allocation5 + $0x318] sm:$0xff]
    %v179 = vld [vmem:[#allocation5 + $0x320] sm:$0xff]
    %v180 = vld [vmem:[#allocation5 + $0x328] sm:$0xff]
    %v181 = vld [vmem:[#allocation5 + $0x330] sm:$0xff]
    %v182 = vld [vmem:[#allocation5 + $0x338] sm:$0xff]
    %v183 = vld [vmem:[#allocation5 + $0x340] sm:$0xff]
    %v184 = vld [vmem:[#allocation5 + $0x348] sm:$0xff]
    %v185 = vld [vmem:[#allocation5 + $0x350] sm:$0xff]
    %v186 = vld [vmem:[#allocation5 + $0x358] sm:$0xff]
    %v187 = vld [vmem:[#allocation5 + $0x360] sm:$0xff]
    %v188 = vld [vmem:[#allocation5 + $0x368] sm:$0xff]
    %v189 = vld [vmem:[#allocation5 + $0x370] sm:$0xff]
    %v190 = vld [vmem:[#allocation5 + $0x378] sm:$0xff]
    %v191 = vld [vmem:[#allocation5 + $0x380] sm:$0xff]
    %v192 = vld [vmem:[#allocation5 + $0x388] sm:$0xff]
    %v193 = vld [vmem:[#allocation5 + $0x390] sm:$0xff]
    %v194 = vld [vmem:[#allocation5 + $0x398] sm:$0xff]
    %v195 = vld [vmem:[#allocation5 + $0x3a0] sm:$0xff]
    %v196 = vld [vmem:[#allocation5 + $0x3a8] sm:$0xff]
    %v197 = vld [vmem:[#allocation5 + $0x3b0] sm:$0xff]
    %v198 = vld [vmem:[#allocation5 + $0x3b8] sm:$0xff]
    %v199 = vld [vmem:[#allocation5 + $0x3c0] sm:$0xff]
    %v200 = vld [vmem:[#allocation5 + $0x3c8] sm:$0xff]
    %v201 = vld [vmem:[#allocation5 + $0x3d0] sm:$0xff]
    %v202 = vld [vmem:[#allocation5 + $0x3d8] sm:$0xff]
    %v203 = vld [vmem:[#allocation5 + $0x3e0] sm:$0xff]
    %v204 = vld [vmem:[#allocation5 + $0x3e8] sm:$0xff]
    %v205 = vld [vmem:[#allocation5 + $0x3f0] sm:$0xff]
    %v206 = vld [vmem:[#allocation5 + $0x3f8] sm:$0xff]
    %v207 = vld [vmem:[%s2] sm:$0x3]
    %v209 = vlaneseq
    %v210 = vshrl.u32 %v209, 7
    %v211 = vsub.s32 0, %v210
    %v212 = vrot.slane %v207, %v211
    %v213 = vlaneseq
    %v214 = vshrl.u32 %v213, 7
    %v215 = vsub.s32 1, %v214
    %v216 = vrot.slane %v207, %v215
    %v347 = vunpack.c.l.b16 %v79
    %v348 = vunpack.c.h.b16 %v79
    %v349 = vunpack.c.l.b16 %v80
    %v350 = vunpack.c.h.b16 %v80
    %v351 = vunpack.c.l.b16 %v81
    %v352 = vunpack.c.h.b16 %v81
    %v353 = vunpack.c.l.b16 %v82
    %v354 = vunpack.c.h.b16 %v82
    %v355 = vunpack.c.l.b16 %v83
    %v356 = vunpack.c.h.b16 %v83
    %v357 = vunpack.c.l.b16 %v84
    %v358 = vunpack.c.h.b16 %v84
    %v359 = vunpack.c.l.b16 %v85
    %v360 = vunpack.c.h.b16 %v85
    %v361 = vunpack.c.l.b16 %v86
    %v362 = vunpack.c.h.b16 %v86
    %v363 = vunpack.c.l.b16 %v87
    %v364 = vunpack.c.h.b16 %v87
    %v365 = vunpack.c.l.b16 %v88
    %v366 = vunpack.c.h.b16 %v88
    %v367 = vunpack.c.l.b16 %v89
    %v368 = vunpack.c.h.b16 %v89
    %v369 = vunpack.c.l.b16 %v90
    %v370 = vunpack.c.h.b16 %v90
    %v371 = vunpack.c.l.b16 %v91
    %v372 = vunpack.c.h.b16 %v91
    %v373 = vunpack.c.l.b16 %v92
    %v374 = vunpack.c.h.b16 %v92
    %v375 = vunpack.c.l.b16 %v93
    %v376 = vunpack.c.h.b16 %v93
    %v377 = vunpack.c.l.b16 %v94
    %v378 = vunpack.c.h.b16 %v94
    %v379 = vunpack.c.l.b16 %v95
    %v380 = vunpack.c.h.b16 %v95
    %v381 = vunpack.c.l.b16 %v96
    %v382 = vunpack.c.h.b16 %v96
    %v383 = vunpack.c.l.b16 %v97
    %v384 = vunpack.c.h.b16 %v97
    %v385 = vunpack.c.l.b16 %v98
    %v386 = vunpack.c.h.b16 %v98
    %v387 = vunpack.c.l.b16 %v99
    %v388 = vunpack.c.h.b16 %v99
    %v389 = vunpack.c.l.b16 %v100
    %v390 = vunpack.c.h.b16 %v100
    %v391 = vunpack.c.l.b16 %v101
    %v392 = vunpack.c.h.b16 %v101
    %v393 = vunpack.c.l.b16 %v102
    %v394 = vunpack.c.h.b16 %v102
    %v395 = vunpack.c.l.b16 %v103
    %v396 = vunpack.c.h.b16 %v103
    %v397 = vunpack.c.l.b16 %v104
    %v398 = vunpack.c.h.b16 %v104
    %v399 = vunpack.c.l.b16 %v105
    %v400 = vunpack.c.h.b16 %v105
    %v401 = vunpack.c.l.b16 %v106
    %v402 = vunpack.c.h.b16 %v106
    %v403 = vunpack.c.l.b16 %v107
    %v404 = vunpack.c.h.b16 %v107
    %v405 = vunpack.c.l.b16 %v108
    %v406 = vunpack.c.h.b16 %v108
    %v407 = vunpack.c.l.b16 %v109
    %v408 = vunpack.c.h.b16 %v109
    %v409 = vunpack.c.l.b16 %v110
    %v410 = vunpack.c.h.b16 %v110
    %v411 = vunpack.c.l.b16 %v111
    %v412 = vunpack.c.h.b16 %v111
    %v413 = vunpack.c.l.b16 %v112
    %v414 = vunpack.c.h.b16 %v112
    %v415 = vunpack.c.l.b16 %v113
    %v416 = vunpack.c.h.b16 %v113
    %v417 = vunpack.c.l.b16 %v114
    %v418 = vunpack.c.h.b16 %v114
    %v419 = vunpack.c.l.b16 %v115
    %v420 = vunpack.c.h.b16 %v115
    %v421 = vunpack.c.l.b16 %v116
    %v422 = vunpack.c.h.b16 %v116
    %v423 = vunpack.c.l.b16 %v117
    %v424 = vunpack.c.h.b16 %v117
    %v425 = vunpack.c.l.b16 %v118
    %v426 = vunpack.c.h.b16 %v118
    %v427 = vunpack.c.l.b16 %v119
    %v428 = vunpack.c.h.b16 %v119
    %v429 = vunpack.c.l.b16 %v120
    %v430 = vunpack.c.h.b16 %v120
    %v431 = vunpack.c.l.b16 %v121
    %v432 = vunpack.c.h.b16 %v121
    %v433 = vunpack.c.l.b16 %v122
    %v434 = vunpack.c.h.b16 %v122
    %v435 = vunpack.c.l.b16 %v123
    %v436 = vunpack.c.h.b16 %v123
    %v437 = vunpack.c.l.b16 %v124
    %v438 = vunpack.c.h.b16 %v124
    %v439 = vunpack.c.l.b16 %v125
    %v440 = vunpack.c.h.b16 %v125
    %v441 = vunpack.c.l.b16 %v126
    %v442 = vunpack.c.h.b16 %v126
    %v443 = vunpack.c.l.b16 %v127
    %v444 = vunpack.c.h.b16 %v127
    %v445 = vunpack.c.l.b16 %v128
    %v446 = vunpack.c.h.b16 %v128
    %v447 = vunpack.c.l.b16 %v129
    %v448 = vunpack.c.h.b16 %v129
    %v449 = vunpack.c.l.b16 %v130
    %v450 = vunpack.c.h.b16 %v130
    %v451 = vunpack.c.l.b16 %v131
    %v452 = vunpack.c.h.b16 %v131
    %v453 = vunpack.c.l.b16 %v132
    %v454 = vunpack.c.h.b16 %v132
    %v455 = vunpack.c.l.b16 %v133
    %v456 = vunpack.c.h.b16 %v133
    %v457 = vunpack.c.l.b16 %v134
    %v458 = vunpack.c.h.b16 %v134
    %v459 = vunpack.c.l.b16 %v135
    %v460 = vunpack.c.h.b16 %v135
    %v461 = vunpack.c.l.b16 %v136
    %v462 = vunpack.c.h.b16 %v136
    %v463 = vunpack.c.l.b16 %v137
    %v464 = vunpack.c.h.b16 %v137
    %v465 = vunpack.c.l.b16 %v138
    %v466 = vunpack.c.h.b16 %v138
    %v467 = vunpack.c.l.b16 %v139
    %v468 = vunpack.c.h.b16 %v139
    %v469 = vunpack.c.l.b16 %v140
    %v470 = vunpack.c.h.b16 %v140
    %v471 = vunpack.c.l.b16 %v141
    %v472 = vunpack.c.h.b16 %v141
    %v473 = vunpack.c.l.b16 %v142
    %v474 = vunpack.c.h.b16 %v142
    %v475 = vunpack.c.l.b16 %v143
    %v476 = vunpack.c.h.b16 %v143
    %v477 = vunpack.c.l.b16 %v144
    %v478 = vunpack.c.h.b16 %v144
    %v479 = vunpack.c.l.b16 %v145
    %v480 = vunpack.c.h.b16 %v145
    %v481 = vunpack.c.l.b16 %v146
    %v482 = vunpack.c.h.b16 %v146
    %v483 = vunpack.c.l.b16 %v147
    %v484 = vunpack.c.h.b16 %v147
    %v485 = vunpack.c.l.b16 %v148
    %v486 = vunpack.c.h.b16 %v148
    %v487 = vunpack.c.l.b16 %v149
    %v488 = vunpack.c.h.b16 %v149
    %v489 = vunpack.c.l.b16 %v150
    %v490 = vunpack.c.h.b16 %v150
    %v491 = vunpack.c.l.b16 %v151
    %v492 = vunpack.c.h.b16 %v151
    %v493 = vunpack.c.l.b16 %v152
    %v494 = vunpack.c.h.b16 %v152
    %v495 = vunpack.c.l.b16 %v153
    %v496 = vunpack.c.h.b16 %v153
    %v497 = vunpack.c.l.b16 %v154
    %v498 = vunpack.c.h.b16 %v154
    %v499 = vunpack.c.l.b16 %v155
    %v500 = vunpack.c.h.b16 %v155
    %v501 = vunpack.c.l.b16 %v156
    %v502 = vunpack.c.h.b16 %v156
    %v503 = vunpack.c.l.b16 %v157
    %v504 = vunpack.c.h.b16 %v157
    %v505 = vunpack.c.l.b16 %v158
    %v506 = vunpack.c.h.b16 %v158
    %v507 = vunpack.c.l.b16 %v159
    %v508 = vunpack.c.h.b16 %v159
    %v509 = vunpack.c.l.b16 %v160
    %v510 = vunpack.c.h.b16 %v160
    %v511 = vunpack.c.l.b16 %v161
    %v512 = vunpack.c.h.b16 %v161
    %v513 = vunpack.c.l.b16 %v162
    %v514 = vunpack.c.h.b16 %v162
    %v515 = vunpack.c.l.b16 %v163
    %v516 = vunpack.c.h.b16 %v163
    %v517 = vunpack.c.l.b16 %v164
    %v518 = vunpack.c.h.b16 %v164
    %v519 = vunpack.c.l.b16 %v165
    %v520 = vunpack.c.h.b16 %v165
    %v521 = vunpack.c.l.b16 %v166
    %v522 = vunpack.c.h.b16 %v166
    %v523 = vunpack.c.l.b16 %v167
    %v524 = vunpack.c.h.b16 %v167
    %v525 = vunpack.c.l.b16 %v168
    %v526 = vunpack.c.h.b16 %v168
    %v527 = vunpack.c.l.b16 %v169
    %v528 = vunpack.c.h.b16 %v169
    %v529 = vunpack.c.l.b16 %v170
    %v530 = vunpack.c.h.b16 %v170
    %v531 = vunpack.c.l.b16 %v171
    %v532 = vunpack.c.h.b16 %v171
    %v533 = vunpack.c.l.b16 %v172
    %v534 = vunpack.c.h.b16 %v172
    %v535 = vunpack.c.l.b16 %v173
    %v536 = vunpack.c.h.b16 %v173
    %v537 = vunpack.c.l.b16 %v174
    %v538 = vunpack.c.h.b16 %v174
    %v539 = vunpack.c.l.b16 %v175
    %v540 = vunpack.c.h.b16 %v175
    %v541 = vunpack.c.l.b16 %v176
    %v542 = vunpack.c.h.b16 %v176
    %v543 = vunpack.c.l.b16 %v177
    %v544 = vunpack.c.h.b16 %v177
    %v545 = vunpack.c.l.b16 %v178
    %v546 = vunpack.c.h.b16 %v178
    %v547 = vunpack.c.l.b16 %v179
    %v548 = vunpack.c.h.b16 %v179
    %v549 = vunpack.c.l.b16 %v180
    %v550 = vunpack.c.h.b16 %v180
    %v551 = vunpack.c.l.b16 %v181
    %v552 = vunpack.c.h.b16 %v181
    %v553 = vunpack.c.l.b16 %v182
    %v554 = vunpack.c.h.b16 %v182
    %v555 = vunpack.c.l.b16 %v183
    %v556 = vunpack.c.h.b16 %v183
    %v557 = vunpack.c.l.b16 %v184
    %v558 = vunpack.c.h.b16 %v184
    %v559 = vunpack.c.l.b16 %v185
    %v560 = vunpack.c.h.b16 %v185
    %v561 = vunpack.c.l.b16 %v186
    %v562 = vunpack.c.h.b16 %v186
    %v563 = vunpack.c.l.b16 %v187
    %v564 = vunpack.c.h.b16 %v187
    %v565 = vunpack.c.l.b16 %v188
    %v566 = vunpack.c.h.b16 %v188
    %v567 = vunpack.c.l.b16 %v189
    %v568 = vunpack.c.h.b16 %v189
    %v569 = vunpack.c.l.b16 %v190
    %v570 = vunpack.c.h.b16 %v190
    %v571 = vunpack.c.l.b16 %v191
    %v572 = vunpack.c.h.b16 %v191
    %v573 = vunpack.c.l.b16 %v192
    %v574 = vunpack.c.h.b16 %v192
    %v575 = vunpack.c.l.b16 %v193
    %v576 = vunpack.c.h.b16 %v193
    %v577 = vunpack.c.l.b16 %v194
    %v578 = vunpack.c.h.b16 %v194
    %v579 = vunpack.c.l.b16 %v195
    %v580 = vunpack.c.h.b16 %v195
    %v581 = vunpack.c.l.b16 %v196
    %v582 = vunpack.c.h.b16 %v196
    %v583 = vunpack.c.l.b16 %v197
    %v584 = vunpack.c.h.b16 %v197
    %v585 = vunpack.c.l.b16 %v198
    %v586 = vunpack.c.h.b16 %v198
    %v587 = vunpack.c.l.b16 %v199
    %v588 = vunpack.c.h.b16 %v199
    %v589 = vunpack.c.l.b16 %v200
    %v590 = vunpack.c.h.b16 %v200
    %v591 = vunpack.c.l.b16 %v201
    %v592 = vunpack.c.h.b16 %v201
    %v593 = vunpack.c.l.b16 %v202
    %v594 = vunpack.c.h.b16 %v202
    %v595 = vunpack.c.l.b16 %v203
    %v596 = vunpack.c.h.b16 %v203
    %v597 = vunpack.c.l.b16 %v204
    %v598 = vunpack.c.h.b16 %v204
    %v599 = vunpack.c.l.b16 %v205
    %v600 = vunpack.c.h.b16 %v205
    %v601 = vunpack.c.l.b16 %v206
    %v602 = vunpack.c.h.b16 %v206
    %v603 = vpack.c.b16 %v349, %v347
    %v604 = vpack.c.b16 %v350, %v348
    %v605 = vpack.c.b16 %v353, %v351
    %v606 = vpack.c.b16 %v354, %v352
    %v607 = vpack.c.b16 %v357, %v355
    %v608 = vpack.c.b16 %v358, %v356
    %v609 = vpack.c.b16 %v361, %v359
    %v610 = vpack.c.b16 %v362, %v360
    %v611 = vpack.c.b16 %v365, %v363
    %v612 = vpack.c.b16 %v366, %v364
    %v613 = vpack.c.b16 %v369, %v367
    %v614 = vpack.c.b16 %v370, %v368
    %v615 = vpack.c.b16 %v373, %v371
    %v616 = vpack.c.b16 %v374, %v372
    %v617 = vpack.c.b16 %v377, %v375
    %v618 = vpack.c.b16 %v378, %v376
    %v619 = vpack.c.b16 %v381, %v379
    %v620 = vpack.c.b16 %v382, %v380
    %v621 = vpack.c.b16 %v385, %v383
    %v622 = vpack.c.b16 %v386, %v384
    %v623 = vpack.c.b16 %v389, %v387
    %v624 = vpack.c.b16 %v390, %v388
    %v625 = vpack.c.b16 %v393, %v391
    %v626 = vpack.c.b16 %v394, %v392
    %v627 = vpack.c.b16 %v397, %v395
    %v628 = vpack.c.b16 %v398, %v396
    %v629 = vpack.c.b16 %v401, %v399
    %v630 = vpack.c.b16 %v402, %v400
    %v631 = vpack.c.b16 %v405, %v403
    %v632 = vpack.c.b16 %v406, %v404
    %v633 = vpack.c.b16 %v409, %v407
    %v634 = vpack.c.b16 %v410, %v408
    %v635 = vpack.c.b16 %v413, %v411
    %v636 = vpack.c.b16 %v414, %v412
    %v637 = vpack.c.b16 %v417, %v415
    %v638 = vpack.c.b16 %v418, %v416
    %v639 = vpack.c.b16 %v421, %v419
    %v640 = vpack.c.b16 %v422, %v420
    %v641 = vpack.c.b16 %v425, %v423
    %v642 = vpack.c.b16 %v426, %v424
    %v643 = vpack.c.b16 %v429, %v427
    %v644 = vpack.c.b16 %v430, %v428
    %v645 = vpack.c.b16 %v433, %v431
    %v646 = vpack.c.b16 %v434, %v432
    %v647 = vpack.c.b16 %v437, %v435
    %v648 = vpack.c.b16 %v438, %v436
    %v649 = vpack.c.b16 %v441, %v439
    %v650 = vpack.c.b16 %v442, %v440
    %v651 = vpack.c.b16 %v445, %v443
    %v652 = vpack.c.b16 %v446, %v444
    %v653 = vpack.c.b16 %v449, %v447
    %v654 = vpack.c.b16 %v450, %v448
    %v655 = vpack.c.b16 %v453, %v451
    %v656 = vpack.c.b16 %v454, %v452
    %v657 = vpack.c.b16 %v457, %v455
    %v658 = vpack.c.b16 %v458, %v456
    %v659 = vpack.c.b16 %v461, %v459
    %v660 = vpack.c.b16 %v462, %v460
    %v661 = vpack.c.b16 %v465, %v463
    %v662 = vpack.c.b16 %v466, %v464
    %v663 = vpack.c.b16 %v469, %v467
    %v664 = vpack.c.b16 %v470, %v468
    %v665 = vpack.c.b16 %v473, %v471
    %v666 = vpack.c.b16 %v474, %v472
    %v667 = vpack.c.b16 %v477, %v475
    %v668 = vpack.c.b16 %v478, %v476
    %v669 = vpack.c.b16 %v481, %v479
    %v670 = vpack.c.b16 %v482, %v480
    %v671 = vpack.c.b16 %v485, %v483
    %v672 = vpack.c.b16 %v486, %v484
    %v673 = vpack.c.b16 %v489, %v487
    %v674 = vpack.c.b16 %v490, %v488
    %v675 = vpack.c.b16 %v493, %v491
    %v676 = vpack.c.b16 %v494, %v492
    %v677 = vpack.c.b16 %v497, %v495
    %v678 = vpack.c.b16 %v498, %v496
    %v679 = vpack.c.b16 %v501, %v499
    %v680 = vpack.c.b16 %v502, %v500
    %v681 = vpack.c.b16 %v505, %v503
    %v682 = vpack.c.b16 %v506, %v504
    %v683 = vpack.c.b16 %v509, %v507
    %v684 = vpack.c.b16 %v510, %v508
    %v685 = vpack.c.b16 %v513, %v511
    %v686 = vpack.c.b16 %v514, %v512
    %v687 = vpack.c.b16 %v517, %v515
    %v688 = vpack.c.b16 %v518, %v516
    %v689 = vpack.c.b16 %v521, %v519
    %v690 = vpack.c.b16 %v522, %v520
    %v691 = vpack.c.b16 %v525, %v523
    %v692 = vpack.c.b16 %v526, %v524
    %v693 = vpack.c.b16 %v529, %v527
    %v694 = vpack.c.b16 %v530, %v528
    %v695 = vpack.c.b16 %v533, %v531
    %v696 = vpack.c.b16 %v534, %v532
    %v697 = vpack.c.b16 %v537, %v535
    %v698 = vpack.c.b16 %v538, %v536
    %v699 = vpack.c.b16 %v541, %v539
    %v700 = vpack.c.b16 %v542, %v540
    %v701 = vpack.c.b16 %v545, %v543
    %v702 = vpack.c.b16 %v546, %v544
    %v703 = vpack.c.b16 %v549, %v547
    %v704 = vpack.c.b16 %v550, %v548
    %v705 = vpack.c.b16 %v553, %v551
    %v706 = vpack.c.b16 %v554, %v552
    %v707 = vpack.c.b16 %v557, %v555
    %v708 = vpack.c.b16 %v558, %v556
    %v709 = vpack.c.b16 %v561, %v559
    %v710 = vpack.c.b16 %v562, %v560
    %v711 = vpack.c.b16 %v565, %v563
    %v712 = vpack.c.b16 %v566, %v564
    %v713 = vpack.c.b16 %v569, %v567
    %v714 = vpack.c.b16 %v570, %v568
    %v715 = vpack.c.b16 %v573, %v571
    %v716 = vpack.c.b16 %v574, %v572
    %v717 = vpack.c.b16 %v577, %v575
    %v718 = vpack.c.b16 %v578, %v576
    %v719 = vpack.c.b16 %v581, %v579
    %v720 = vpack.c.b16 %v582, %v580
    %v721 = vpack.c.b16 %v585, %v583
    %v722 = vpack.c.b16 %v586, %v584
    %v723 = vpack.c.b16 %v589, %v587
    %v724 = vpack.c.b16 %v590, %v588
    %v725 = vpack.c.b16 %v593, %v591
    %v726 = vpack.c.b16 %v594, %v592
    %v727 = vpack.c.b16 %v597, %v595
    %v728 = vpack.c.b16 %v598, %v596
    %v729 = vpack.c.b16 %v601, %v599
    %v730 = vpack.c.b16 %v602, %v600
    %859 = vmatprep.subr.bf16.mxu0 %v618
    %860 = vmatpush1.bf16.msra.mxu0 %v617
    %861 = vmatprep.subr.bf16.mxu0 %v616
    %862 = vmatpush1.bf16.msra.mxu0 %v615
    %863 = vmatprep.subr.bf16.mxu0 %v614
    %864 = vmatpush1.bf16.msra.mxu0 %v613
    %865 = vmatprep.subr.bf16.mxu0 %v612
    %866 = vmatpush1.bf16.msra.mxu0 %v611
    %867 = vmatprep.subr.bf16.mxu0 %v610
    %868 = vmatpush1.bf16.msra.mxu0 %v609
    %869 = vmatprep.subr.bf16.mxu0 %v608
    %870 = vmatpush1.bf16.msra.mxu0 %v607
    %871 = vmatprep.subr.bf16.mxu0 %v606
    %872 = vmatpush1.bf16.msra.mxu0 %v605
    %873 = vmatprep.subr.bf16.mxu0 %v604
    %874 = vmatpush1.bf16.msra.mxu0 %v603
    %875 = vmatprep.subr.bf16.mxu0 %v634
    %876 = vmatpush2.bf16.msra.mxu0 %v633
    %877 = vmatprep.subr.bf16.mxu0 %v632
    %878 = vmatpush2.bf16.msra.mxu0 %v631
    %879 = vmatprep.subr.bf16.mxu0 %v630
    %880 = vmatpush2.bf16.msra.mxu0 %v629
    %881 = vmatprep.subr.bf16.mxu0 %v628
    %882 = vmatpush2.bf16.msra.mxu0 %v627
    %883 = vmatprep.subr.bf16.mxu0 %v626
    %884 = vmatpush2.bf16.msra.mxu0 %v625
    %885 = vmatprep.subr.bf16.mxu0 %v624
    %886 = vmatpush2.bf16.msra.mxu0 %v623
    %887 = vmatprep.subr.bf16.mxu0 %v622
    %888 = vmatpush2.bf16.msra.mxu0 %v621
    %889 = vmatprep.subr.bf16.mxu0 %v620
    %890 = vmatpush2.bf16.msra.mxu0 %v619
    %891 = vmatprep.mubr.bf16.mxu0 %v72
    %892 = vmatmul.mubr.bf16.gmra.mxu0 %v71
    %v893 = vpop.f32.mrf.mxu0
    %v894 = vadd.f32 %v212, %v893
    %v895 = vpop.f32.mrf.mxu0
    %v896 = vadd.f32 %v216, %v895
    %v897 = vpop.f32.mrf.mxu0
    %v898 = vpop.f32.mrf.mxu0
    %899 = vdwg.mxu0
    %900 = vmatprep.subr.bf16.mxu0 %v650
    %901 = vmatpush1.bf16.msra.mxu0 %v649
    %902 = vmatprep.subr.bf16.mxu0 %v648
    %903 = vmatpush1.bf16.msra.mxu0 %v647
    %904 = vmatprep.subr.bf16.mxu0 %v646
    %905 = vmatpush1.bf16.msra.mxu0 %v645
    %906 = vmatprep.subr.bf16.mxu0 %v644
    %907 = vmatpush1.bf16.msra.mxu0 %v643
    %908 = vmatprep.subr.bf16.mxu0 %v642
    %909 = vmatpush1.bf16.msra.mxu0 %v641
    %910 = vmatprep.subr.bf16.mxu0 %v640
    %911 = vmatpush1.bf16.msra.mxu0 %v639
    %912 = vmatprep.subr.bf16.mxu0 %v638
    %913 = vmatpush1.bf16.msra.mxu0 %v637
    %914 = vmatprep.subr.bf16.mxu0 %v636
    %915 = vmatpush1.bf16.msra.mxu0 %v635
    %916 = vmatprep.subr.bf16.mxu0 %v666
    %917 = vmatpush2.bf16.msra.mxu0 %v665
    %918 = vmatprep.subr.bf16.mxu0 %v664
    %919 = vmatpush2.bf16.msra.mxu0 %v663
    %920 = vmatprep.subr.bf16.mxu0 %v662
    %921 = vmatpush2.bf16.msra.mxu0 %v661
    %922 = vmatprep.subr.bf16.mxu0 %v660
    %923 = vmatpush2.bf16.msra.mxu0 %v659
    %924 = vmatprep.subr.bf16.mxu0 %v658
    %925 = vmatpush2.bf16.msra.mxu0 %v657
    %926 = vmatprep.subr.bf16.mxu0 %v656
    %927 = vmatpush2.bf16.msra.mxu0 %v655
    %928 = vmatprep.subr.bf16.mxu0 %v654
    %929 = vmatpush2.bf16.msra.mxu0 %v653
    %930 = vmatprep.subr.bf16.mxu0 %v652
    %931 = vmatpush2.bf16.msra.mxu0 %v651
    %932 = vmatprep.mubr.bf16.mxu0 %v74
    %933 = vmatmul.mubr.bf16.gmra.mxu0 %v73
    %v934 = vpop.f32.mrf.mxu0
    %v935 = vadd.f32 %v894, %v934
    %v936 = vpop.f32.mrf.mxu0
    %v937 = vadd.f32 %v896, %v936
    %v938 = vpop.f32.mrf.mxu0
    %v939 = vpop.f32.mrf.mxu0
    %940 = vdwg.mxu0
    %941 = vmatprep.subr.bf16.mxu0 %v682
    %942 = vmatpush1.bf16.msra.mxu0 %v681
    %943 = vmatprep.subr.bf16.mxu0 %v680
    %944 = vmatpush1.bf16.msra.mxu0 %v679
    %945 = vmatprep.subr.bf16.mxu0 %v678
    %946 = vmatpush1.bf16.msra.mxu0 %v677
    %947 = vmatprep.subr.bf16.mxu0 %v676
    %948 = vmatpush1.bf16.msra.mxu0 %v675
    %949 = vmatprep.subr.bf16.mxu0 %v674
    %950 = vmatpush1.bf16.msra.mxu0 %v673
    %951 = vmatprep.subr.bf16.mxu0 %v672
    %952 = vmatpush1.bf16.msra.mxu0 %v671
    %953 = vmatprep.subr.bf16.mxu0 %v670
    %954 = vmatpush1.bf16.msra.mxu0 %v669
    %955 = vmatprep.subr.bf16.mxu0 %v668
    %956 = vmatpush1.bf16.msra.mxu0 %v667
    %957 = vmatprep.subr.bf16.mxu0 %v698
    %958 = vmatpush2.bf16.msra.mxu0 %v697
    %959 = vmatprep.subr.bf16.mxu0 %v696
    %960 = vmatpush2.bf16.msra.mxu0 %v695
    %961 = vmatprep.subr.bf16.mxu0 %v694
    %962 = vmatpush2.bf16.msra.mxu0 %v693
    %963 = vmatprep.subr.bf16.mxu0 %v692
    %964 = vmatpush2.bf16.msra.mxu0 %v691
    %965 = vmatprep.subr.bf16.mxu0 %v690
    %966 = vmatpush2.bf16.msra.mxu0 %v689
    %967 = vmatprep.subr.bf16.mxu0 %v688
    %968 = vmatpush2.bf16.msra.mxu0 %v687
    %969 = vmatprep.subr.bf16.mxu0 %v686
    %970 = vmatpush2.bf16.msra.mxu0 %v685
    %971 = vmatprep.subr.bf16.mxu0 %v684
    %972 = vmatpush2.bf16.msra.mxu0 %v683
    %973 = vmatprep.mubr.bf16.mxu0 %v76
    %974 = vmatmul.mubr.bf16.gmra.mxu0 %v75
    %v975 = vpop.f32.mrf.mxu0
    %v976 = vadd.f32 %v935, %v975
    %v977 = vpop.f32.mrf.mxu0
    %v978 = vadd.f32 %v937, %v977
    %v979 = vpop.f32.mrf.mxu0
    %v980 = vpop.f32.mrf.mxu0
    %981 = vdwg.mxu0
    %982 = vmatprep.subr.bf16.mxu0 %v714
    %983 = vmatpush1.bf16.msra.mxu0 %v713
    %984 = vmatprep.subr.bf16.mxu0 %v712
    %985 = vmatpush1.bf16.msra.mxu0 %v711
    %986 = vmatprep.subr.bf16.mxu0 %v710
    %987 = vmatpush1.bf16.msra.mxu0 %v709
    %988 = vmatprep.subr.bf16.mxu0 %v708
    %989 = vmatpush1.bf16.msra.mxu0 %v707
    %990 = vmatprep.subr.bf16.mxu0 %v706
    %991 = vmatpush1.bf16.msra.mxu0 %v705
    %992 = vmatprep.subr.bf16.mxu0 %v704
    %993 = vmatpush1.bf16.msra.mxu0 %v703
    %994 = vmatprep.subr.bf16.mxu0 %v702
    %995 = vmatpush1.bf16.msra.mxu0 %v701
    %996 = vmatprep.subr.bf16.mxu0 %v700
    %997 = vmatpush1.bf16.msra.mxu0 %v699
    %998 = vmatprep.subr.bf16.mxu0 %v730
    %999 = vmatpush2.bf16.msra.mxu0 %v729
    %1000 = vmatprep.subr.bf16.mxu0 %v728
    %1001 = vmatpush2.bf16.msra.mxu0 %v727
    %1002 = vmatprep.subr.bf16.mxu0 %v726
    %1003 = vmatpush2.bf16.msra.mxu0 %v725
    %1004 = vmatprep.subr.bf16.mxu0 %v724
    %1005 = vmatpush2.bf16.msra.mxu0 %v723
    %1006 = vmatprep.subr.bf16.mxu0 %v722
    %1007 = vmatpush2.bf16.msra.mxu0 %v721
    %1008 = vmatprep.subr.bf16.mxu0 %v720
    %1009 = vmatpush2.bf16.msra.mxu0 %v719
    %1010 = vmatprep.subr.bf16.mxu0 %v718
    %1011 = vmatpush2.bf16.msra.mxu0 %v717
    %1012 = vmatprep.subr.bf16.mxu0 %v716
    %1013 = vmatpush2.bf16.msra.mxu0 %v715
    %1014 = vmatprep.mubr.bf16.mxu0 %v78
    %1015 = vmatmul.mubr.bf16.gmra.mxu0 %v77
    %v1016 = vpop.f32.mrf.mxu0
    %v1017 = vadd.f32 %v976, %v1016
    %v1018 = vpop.f32.mrf.mxu0
    %v1019 = vadd.f32 %v978, %v1018
    %v1020 = vpop.f32.mrf.mxu0
    %v1021 = vpop.f32.mrf.mxu0
    %1022 = vdwg.mxu0
    %vm1023 = vcmp.gt.f32.partialorder %v1017, 0.0
    %vm1024 = vcmp.gt.f32.partialorder %v1019, 0.0
    %v1025 = vmul.f32 %v1017, 0.2
    %v1026 = vmul.f32 %v1019, 0.2
    %v1027 = vsel %vm1023, %v1017, %v1025
    %v1028 = vsel %vm1024, %v1019, %v1026
    %v1029 = vpack.c.bf16 %v1027, %v1027
    %v1030 = vpack.c.bf16 %v1028, %v1028
    %v1031 = vld [vmem:[#allocation7] sm:$0xff]
    %v1032 = vld [vmem:[#allocation7 + $0x8] sm:$0xff]
    %v1033 = vld [vmem:[#allocation7 + $0x10] sm:$0xff]
    %v1034 = vld [vmem:[#allocation7 + $0x18] sm:$0xff]
    %v1035 = vld [vmem:[#allocation7 + $0x20] sm:$0xff]
    %v1036 = vld [vmem:[#allocation7 + $0x28] sm:$0xff]
    %v1037 = vld [vmem:[#allocation7 + $0x30] sm:$0xff]
    %v1038 = vld [vmem:[#allocation7 + $0x38] sm:$0xff]
    %v1039 = vld [vmem:[#allocation7 + $0x40] sm:$0xff]
    %v1040 = vld [vmem:[#allocation7 + $0x48] sm:$0xff]
    %v1041 = vld [vmem:[#allocation7 + $0x50] sm:$0xff]
    %v1042 = vld [vmem:[#allocation7 + $0x58] sm:$0xff]
    %v1043 = vld [vmem:[#allocation7 + $0x60] sm:$0xff]
    %v1044 = vld [vmem:[#allocation7 + $0x68] sm:$0xff]
    %v1045 = vld [vmem:[#allocation7 + $0x70] sm:$0xff]
    %v1046 = vld [vmem:[#allocation7 + $0x78] sm:$0xff]
    %v1047 = vld [vmem:[#allocation7 + $0x80] sm:$0xff]
    %v1048 = vld [vmem:[#allocation7 + $0x88] sm:$0xff]
    %v1049 = vld [vmem:[#allocation7 + $0x90] sm:$0xff]
    %v1050 = vld [vmem:[#allocation7 + $0x98] sm:$0xff]
    %v1051 = vld [vmem:[#allocation7 + $0xa0] sm:$0xff]
    %v1052 = vld [vmem:[#allocation7 + $0xa8] sm:$0xff]
    %v1053 = vld [vmem:[#allocation7 + $0xb0] sm:$0xff]
    %v1054 = vld [vmem:[#allocation7 + $0xb8] sm:$0xff]
    %v1055 = vld [vmem:[#allocation7 + $0xc0] sm:$0xff]
    %v1056 = vld [vmem:[#allocation7 + $0xc8] sm:$0xff]
    %v1057 = vld [vmem:[#allocation7 + $0xd0] sm:$0xff]
    %v1058 = vld [vmem:[#allocation7 + $0xd8] sm:$0xff]
    %v1059 = vld [vmem:[#allocation7 + $0xe0] sm:$0xff]
    %v1060 = vld [vmem:[#allocation7 + $0xe8] sm:$0xff]
    %v1061 = vld [vmem:[#allocation7 + $0xf0] sm:$0xff]
    %v1062 = vld [vmem:[#allocation7 + $0xf8] sm:$0xff]
    %v1063 = vld [vmem:[%s4] sm:$0x3]
    %v1065 = vlaneseq
    %v1066 = vshrl.u32 %v1065, 7
    %v1067 = vsub.s32 0, %v1066
    %v1068 = vrot.slane %v1063, %v1067
    %v1069 = vlaneseq
    %v1070 = vshrl.u32 %v1069, 7
    %v1071 = vsub.s32 1, %v1070
    %v1072 = vrot.slane %v1063, %v1071
    %v1107 = vunpack.c.l.b16 %v1031
    %v1108 = vunpack.c.h.b16 %v1031
    %v1109 = vunpack.c.l.b16 %v1032
    %v1110 = vunpack.c.h.b16 %v1032
    %v1111 = vunpack.c.l.b16 %v1033
    %v1112 = vunpack.c.h.b16 %v1033
    %v1113 = vunpack.c.l.b16 %v1034
    %v1114 = vunpack.c.h.b16 %v1034
    %v1115 = vunpack.c.l.b16 %v1035
    %v1116 = vunpack.c.h.b16 %v1035
    %v1117 = vunpack.c.l.b16 %v1036
    %v1118 = vunpack.c.h.b16 %v1036
    %v1119 = vunpack.c.l.b16 %v1037
    %v1120 = vunpack.c.h.b16 %v1037
    %v1121 = vunpack.c.l.b16 %v1038
    %v1122 = vunpack.c.h.b16 %v1038
    %v1123 = vunpack.c.l.b16 %v1039
    %v1124 = vunpack.c.h.b16 %v1039
    %v1125 = vunpack.c.l.b16 %v1040
    %v1126 = vunpack.c.h.b16 %v1040
    %v1127 = vunpack.c.l.b16 %v1041
    %v1128 = vunpack.c.h.b16 %v1041
    %v1129 = vunpack.c.l.b16 %v1042
    %v1130 = vunpack.c.h.b16 %v1042
    %v1131 = vunpack.c.l.b16 %v1043
    %v1132 = vunpack.c.h.b16 %v1043
    %v1133 = vunpack.c.l.b16 %v1044
    %v1134 = vunpack.c.h.b16 %v1044
    %v1135 = vunpack.c.l.b16 %v1045
    %v1136 = vunpack.c.h.b16 %v1045
    %v1137 = vunpack.c.l.b16 %v1046
    %v1138 = vunpack.c.h.b16 %v1046
    %v1139 = vunpack.c.l.b16 %v1047
    %v1140 = vunpack.c.h.b16 %v1047
    %v1141 = vunpack.c.l.b16 %v1048
    %v1142 = vunpack.c.h.b16 %v1048
    %v1143 = vunpack.c.l.b16 %v1049
    %v1144 = vunpack.c.h.b16 %v1049
    %v1145 = vunpack.c.l.b16 %v1050
    %v1146 = vunpack.c.h.b16 %v1050
    %v1147 = vunpack.c.l.b16 %v1051
    %v1148 = vunpack.c.h.b16 %v1051
    %v1149 = vunpack.c.l.b16 %v1052
    %v1150 = vunpack.c.h.b16 %v1052
    %v1151 = vunpack.c.l.b16 %v1053
    %v1152 = vunpack.c.h.b16 %v1053
    %v1153 = vunpack.c.l.b16 %v1054
    %v1154 = vunpack.c.h.b16 %v1054
    %v1155 = vunpack.c.l.b16 %v1055
    %v1156 = vunpack.c.h.b16 %v1055
    %v1157 = vunpack.c.l.b16 %v1056
    %v1158 = vunpack.c.h.b16 %v1056
    %v1159 = vunpack.c.l.b16 %v1057
    %v1160 = vunpack.c.h.b16 %v1057
    %v1161 = vunpack.c.l.b16 %v1058
    %v1162 = vunpack.c.h.b16 %v1058
    %v1163 = vunpack.c.l.b16 %v1059
    %v1164 = vunpack.c.h.b16 %v1059
    %v1165 = vunpack.c.l.b16 %v1060
    %v1166 = vunpack.c.h.b16 %v1060
    %v1167 = vunpack.c.l.b16 %v1061
    %v1168 = vunpack.c.h.b16 %v1061
    %v1169 = vunpack.c.l.b16 %v1062
    %v1170 = vunpack.c.h.b16 %v1062
    %v1171 = vpack.c.b16 %v1109, %v1107
    %v1172 = vpack.c.b16 %v1110, %v1108
    %v1173 = vpack.c.b16 %v1113, %v1111
    %v1174 = vpack.c.b16 %v1114, %v1112
    %v1175 = vpack.c.b16 %v1117, %v1115
    %v1176 = vpack.c.b16 %v1118, %v1116
    %v1177 = vpack.c.b16 %v1121, %v1119
    %v1178 = vpack.c.b16 %v1122, %v1120
    %v1179 = vpack.c.b16 %v1125, %v1123
    %v1180 = vpack.c.b16 %v1126, %v1124
    %v1181 = vpack.c.b16 %v1129, %v1127
    %v1182 = vpack.c.b16 %v1130, %v1128
    %v1183 = vpack.c.b16 %v1133, %v1131
    %v1184 = vpack.c.b16 %v1134, %v1132
    %v1185 = vpack.c.b16 %v1137, %v1135
    %v1186 = vpack.c.b16 %v1138, %v1136
    %v1187 = vpack.c.b16 %v1141, %v1139
    %v1188 = vpack.c.b16 %v1142, %v1140
    %v1189 = vpack.c.b16 %v1145, %v1143
    %v1190 = vpack.c.b16 %v1146, %v1144
    %v1191 = vpack.c.b16 %v1149, %v1147
    %v1192 = vpack.c.b16 %v1150, %v1148
    %v1193 = vpack.c.b16 %v1153, %v1151
    %v1194 = vpack.c.b16 %v1154, %v1152
    %v1195 = vpack.c.b16 %v1157, %v1155
    %v1196 = vpack.c.b16 %v1158, %v1156
    %v1197 = vpack.c.b16 %v1161, %v1159
    %v1198 = vpack.c.b16 %v1162, %v1160
    %v1199 = vpack.c.b16 %v1165, %v1163
    %v1200 = vpack.c.b16 %v1166, %v1164
    %v1201 = vpack.c.b16 %v1169, %v1167
    %v1202 = vpack.c.b16 %v1170, %v1168
    %1235 = vmatprep.subr.bf16.mxu0 %v1186
    %1236 = vmatpush1.bf16.msra.mxu0 %v1185
    %1237 = vmatprep.subr.bf16.mxu0 %v1184
    %1238 = vmatpush1.bf16.msra.mxu0 %v1183
    %1239 = vmatprep.subr.bf16.mxu0 %v1182
    %1240 = vmatpush1.bf16.msra.mxu0 %v1181
    %1241 = vmatprep.subr.bf16.mxu0 %v1180
    %1242 = vmatpush1.bf16.msra.mxu0 %v1179
    %1243 = vmatprep.subr.bf16.mxu0 %v1178
    %1244 = vmatpush1.bf16.msra.mxu0 %v1177
    %1245 = vmatprep.subr.bf16.mxu0 %v1176
    %1246 = vmatpush1.bf16.msra.mxu0 %v1175
    %1247 = vmatprep.subr.bf16.mxu0 %v1174
    %1248 = vmatpush1.bf16.msra.mxu0 %v1173
    %1249 = vmatprep.subr.bf16.mxu0 %v1172
    %1250 = vmatpush1.bf16.msra.mxu0 %v1171
    %1251 = vmatprep.subr.bf16.mxu0 %v1202
    %1252 = vmatpush2.bf16.msra.mxu0 %v1201
    %1253 = vmatprep.subr.bf16.mxu0 %v1200
    %1254 = vmatpush2.bf16.msra.mxu0 %v1199
    %1255 = vmatprep.subr.bf16.mxu0 %v1198
    %1256 = vmatpush2.bf16.msra.mxu0 %v1197
    %1257 = vmatprep.subr.bf16.mxu0 %v1196
    %1258 = vmatpush2.bf16.msra.mxu0 %v1195
    %1259 = vmatprep.subr.bf16.mxu0 %v1194
    %1260 = vmatpush2.bf16.msra.mxu0 %v1193
    %1261 = vmatprep.subr.bf16.mxu0 %v1192
    %1262 = vmatpush2.bf16.msra.mxu0 %v1191
    %1263 = vmatprep.subr.bf16.mxu0 %v1190
    %1264 = vmatpush2.bf16.msra.mxu0 %v1189
    %1265 = vmatprep.subr.bf16.mxu0 %v1188
    %1266 = vmatpush2.bf16.msra.mxu0 %v1187
    %1267 = vmatprep.mubr.bf16.mxu0 %v1030
    %1268 = vmatmul.mubr.bf16.gmra.mxu0 %v1029
    %v1269 = vpop.f32.mrf.mxu0
    %v1270 = vadd.f32 %v1068, %v1269
    %v1271 = vpop.f32.mrf.mxu0
    %v1272 = vadd.f32 %v1072, %v1271
    %v1273 = vpop.f32.mrf.mxu0
    %v1274 = vpop.f32.mrf.mxu0
    %1275 = vdwg.mxu0
    %1276 = vst [vmem:[#allocation8] sm:$0xff] %v1270
    %1277 = vst [vmem:[#allocation9] sm:$0xff] %v1272
    // Predicated region
    $region34: #{tpu_custom_call.1} parent=1 // pred_check
      _
    $region35: #{tpu_custom_call.1} parent=1 // pred_check_branch
      %1279 = sbr.rel (0) target = $region37
    $region36: #{tpu_custom_call.1} parent=1 // pred_region
      %s1281 = ssub.s32 128, 128
      %1282 = vsyncadd [#allocation4], %s1281
      %s1284 = sshll.u32 [#allocation8], 4
      %s1285 = int_to_ptr.vmem [resolvable:$true] %s1284
      %1287 = dma.vmem_to_hbm [thread:$0]  %s1285, 128, %s5, [#allocation4]
    $region37: #{tpu_custom_call.1} parent=1 // pred_fallthru
      _
    // Predicated region
    $region38: #{tpu_custom_call.1} parent=1 // pred_check
      _
    $region39: #{tpu_custom_call.1} parent=1 // pred_check_branch
      %1289 = sbr.rel (0) target = $region41
    $region40: #{tpu_custom_call.1} parent=1 // pred_region
      %s1291 = ssub.s32 128, 128
      %1292 = vsyncadd [#allocation10], %s1291
      %s1294 = sshll.u32 [#allocation9], 4
      %s1295 = int_to_ptr.vmem [resolvable:$true] %s1294
      %1297 = dma.vmem_to_hbm [thread:$0]  %s1295, 128, %s6, [#allocation10]
    $region41: #{tpu_custom_call.1} parent=1 // pred_fallthru
      _
    // Predicated region
    $region42: #{tpu_custom_call.1} parent=1 // pred_check
      _
    $region43: #{tpu_custom_call.1} parent=1 // pred_check_branch
      %1299 = sbr.rel (0) target = $region45
    $region44: #{tpu_custom_call.1} parent=1 // pred_region
      %1300 = dma.done [#allocation4], 128
    $region45: #{tpu_custom_call.1} parent=1 // pred_fallthru
      _
    // Predicated region
    $region46: #{tpu_custom_call.1} parent=1 // pred_check
      _
    $region47: #{tpu_custom_call.1} parent=1 // pred_check_branch
      %1302 = sbr.rel (0) target = $region49
    $region48: #{tpu_custom_call.1} parent=1 // pred_region
      %1303 = dma.done [#allocation10], 128
    $region49: #{tpu_custom_call.1} parent=1 // pred_fallthru
      _
    %1304 = vsyncpa [#allocation3], 1
    %1305 = vsyncpa [#allocation6], 1
    %1306 = vsyncpa [#allocation4], 1
    %1307 = vsyncpa [#allocation10], 1

</llo_original>
